<compile_context>
chip_gen: v5e
topology: v5e:2x2
jax: 0.10.0
libtpu: 0.0.40
codegen_flags: <defaults>
</compile_context>

<pallas_src>
import functools

import jax
import jax.numpy as jnp
from jax.experimental import pallas as pl
from jax.experimental.pallas import tpu as pltpu


def _residual_block_kernel(x_ref, w_ref, b_ref, m_ref, out_ref, *, W):
    # x_ref   : (1, Cp, L)     L = G*H*W pixels on lanes, channels on sublanes
    # w_ref   : (2, Cp, 9*Cp)  BN-scale-folded conv weights (both convs)
    # b_ref   : (2, Cp, 1)     folded conv-bias + BN bias
    # m_ref   : (9, L)         f32 border masks (padding=1), one row per tap
    # out_ref : (1, Cp, L)
    L = out_ref.shape[2]
    offs = [(dy, dx) for dy in (-1, 0, 1) for dx in (-1, 0, 1)]

    def conv3x3(src, wmat):
        # im2col in registers: 9 rolled+masked taps, each a full sublane tile,
        # concatenated into an aligned (9*Cp, L) patch matrix -> one MXU matmul.
        taps = []
        for k, (dy, dx) in enumerate(offs):
            if dy == 0 and dx == 0:
                taps.append(src)                       # center tap: mask is all-ones
            else:
                s = dy * W + dx                        # want tap[:, p] = src[:, p + s]
                rolled = pltpu.roll(src, shift=(-s) % L, axis=1)   # XLU rotate
                taps.append(rolled * m_ref[k:k + 1, :])
        patches = jnp.concatenate(taps, axis=0)        # (9*Cp, L), sublane aligned
        # TODO(synk): bf16 operands (f32 accumulate) once scaled to real channel
        # counts; irrelevant at Cp=8 / K=72.
        return jnp.dot(wmat, patches, preferred_element_type=jnp.float32)

    x = x_ref[0].astype(jnp.float32)                   # (Cp, L)

    # ---- block 1: conv -> BN(scale folded into W) -> ReLU ----
    y = jnp.maximum(conv3x3(x, w_ref[0]) + b_ref[0], 0.0)
    # ---- block 2: conv -> BN ----
    y = conv3x3(y, w_ref[1]) + b_ref[1]
    # ---- residual add ----
    out_ref[0] = (y + x).astype(out_ref.dtype)


def basic_residual_block(x_nchw, params):
    """Pallas forward. x_nchw: (N, C, H, W) float32 -> (N, C, H, W)."""
    w1, s1, b1, w2, s2, b2 = params
    N, C, H, W = x_nchw.shape
    HW = H * W
    Cp = max(8, ((C + 7) // 8) * 8)        # sublane-tile-aligned channel count

    # 2-way "parallel" grid when possible (one block per v7x TensorCore); the
    # remaining images are folded into the lane axis (amortizes fixed per-step
    # cost on single-TC v5e/v6e).
    NB = 2 if (N % 2 == 0 and N >= 2) else 1
    G = N // NB
    L = G * HW                              # lane axis, multiple of 128

    # ---- parameter prep (static, folded once by XLA) ----
    def prep_w(w, s):                       # w: HWIO (3,3,C,C), s: BN scale (C,)
        w = jnp.transpose(w, (3, 0, 1, 2)) * s.reshape(C, 1, 1, 1)  # fold BN scale
        w = jnp.pad(w, ((0, Cp - C), (0, 0), (0, 0), (0, Cp - C)))
        return w.reshape(Cp, 9 * Cp)        # Wmat[co, (ky*3+kx)*Cp + ci]

    wpack = jnp.stack([prep_w(w1, s1), prep_w(w2, s2)])            # (2, Cp, 9Cp)
    bpack = jnp.stack([jnp.pad(b1, (0, Cp - C)).reshape(Cp, 1),
                       jnp.pad(b2, (0, Cp - C)).reshape(Cp, 1)])   # (2, Cp, 1)

    # ---- border masks for padding=1, hoisted out of the kernel ----
    pix = jnp.arange(L, dtype=jnp.int32) % HW
    hh, ww = pix // W, pix % W
    masks = jnp.stack(
        [((hh + dy >= 0) & (hh + dy < H) & (ww + dx >= 0) & (ww + dx < W))
         for dy in (-1, 0, 1) for dx in (-1, 0, 1)]
    ).astype(jnp.float32)                                          # (9, L)

    # ---- activations: pad channels to Cp, fold G images into the lane axis ----
    x_p = jnp.pad(x_nchw, ((0, 0), (0, Cp - C), (0, 0), (0, 0)))   # (N, Cp, H, W)
    x_fold = (x_p.reshape(NB, G, Cp, HW)
                  .transpose(0, 2, 1, 3)     # no-op relayout for G == 1
                  .reshape(NB, Cp, L))

    kernel = functools.partial(_residual_block_kernel, W=W)

    out = pl.pallas_call(
        kernel,
        out_shape=jax.ShapeDtypeStruct((NB, Cp, L), x_nchw.dtype),
        grid_spec=pltpu.PrefetchScalarGridSpec(
            num_scalar_prefetch=0,
            grid=(NB,),
            in_specs=[
                pl.BlockSpec((1, Cp, L), lambda n: (n, 0, 0)),
                pl.BlockSpec((2, Cp, 9 * Cp), lambda n: (0, 0, 0)),
                pl.BlockSpec((2, Cp, 1), lambda n: (0, 0, 0)),
                pl.BlockSpec((9, L), lambda n: (0, 0)),
            ],
            out_specs=pl.BlockSpec((1, Cp, L), lambda n: (n, 0, 0)),
        ),
        compiler_params=pltpu.CompilerParams(
            dimension_semantics=("parallel",),
            # explicit scoped-VMEM budget keeps the same kernel valid on
            # v5e (16 MiB default) / v6e (32 MiB) / v7x (64 MiB physical)
            vmem_limit_bytes=32 * 1024 * 1024,
        ),
    )(x_fold, wpack, bpack, masks)

    out = (out.reshape(NB, Cp, G, HW)
              .transpose(0, 2, 1, 3)
              .reshape(N, Cp, H, W))
    return out[:, :C]


def make_params(key, channel_num, eps=1e-5):
    """Deterministic synthetic parameters (Conv2d + BatchNorm2d, folded)."""
    C = channel_num
    ks = jax.random.split(key, 12)

    def one_block(k0, k1, k2, k3, k4, k5):
        w = 0.1 * jax.random.normal(k0, (3, 3, C, C), jnp.float32)   # HWIO
        conv_b = 0.1 * jax.random.normal(k1, (C,), jnp.float32)
        gamma = 1.0 + 0.1 * jax.random.normal(k2, (C,), jnp.float32)
        beta = 0.1 * jax.random.normal(k3, (C,), jnp.float32)
        rmean = 0.1 * jax.random.normal(k4, (C,), jnp.float32)
        rvar = 1.0 + 0.1 * jnp.abs(jax.random.normal(k5, (C,), jnp.float32))
        scale = gamma / jnp.sqrt(rvar + eps)
        bias = (conv_b - rmean) * scale + beta
        return w, scale, bias

    w1, s1, b1 = one_block(*ks[0:6])
    w2, s2, b2 = one_block(*ks[6:12])
    return (w1, s1, b1, w2, s2, b2)


def reference(x_nchw, params):
    """Pure-JAX reference of the same folded forward pass."""
    w1, s1, b1, w2, s2, b2 = params
    N, C, H, W = x_nchw.shape
    x = jnp.transpose(x_nchw, (0, 2, 3, 1))

    def conv(v, w):
        return jax.lax.conv_general_dilated(
            v, w, window_strides=(1, 1), padding="SAME",
            dimension_numbers=("NHWC", "HWIO", "NHWC"),
            precision=jax.lax.Precision.HIGHEST)

    y = conv(x, w1) * s1.reshape(1, 1, 1, C) + b1.reshape(1, 1, 1, C)
    y = jnp.maximum(y, 0.0)
    y = conv(y, w2) * s2.reshape(1, 1, 1, C) + b2.reshape(1, 1, 1, C)
    y = y + x
    return jnp.transpose(y, (0, 3, 1, 2))


if __name__ == "__main__":
    key = jax.random.PRNGKey(0)
    k_x, k_p = jax.random.split(key)

    N, C, H, W = 2, 4, 16, 16                 # small NCHW input, like PyTorch
    x = jax.random.normal(k_x, (N, C, H, W), jnp.float32)
    params = make_params(k_p, C)

    out = basic_residual_block(x, params)
    out = jax.block_until_ready(out)

    ref = jax.block_until_ready(reference(x, params))
    assert out.shape == (N, C, H, W)
    assert jnp.allclose(out, ref, rtol=1e-2, atol=1e-2), (
        f"max abs diff = {jnp.max(jnp.abs(out - ref))}")

    print("KERNEL_OK")
</pallas_src>

<mosaic_0001>
module attributes {stable_mosaic.version = 11 : i64} {
  func.func @_residual_block_kernel(%arg0: i32, %arg1: memref<1x8x256xf32, #tpu.memory_space<vmem>>, %arg2: memref<2x8x72xf32, #tpu.memory_space<vmem>>, %arg3: memref<2x8x1xf32, #tpu.memory_space<vmem>>, %arg4: memref<9x256xf32, #tpu.memory_space<vmem>>, %arg5: memref<1x8x256xf32, #tpu.memory_space<vmem>>) attributes {dimension_semantics = [#tpu.dimension_semantics<parallel>], iteration_bounds = array<i64: 2>, scalar_prefetch = 0 : i64, scratch_operands = 0 : i64, tpu.core_type = #tpu.core_type<tc>, window_params = [{transform_indices = @transform_0, window_bounds = array<i64: 1, 8, 256>}, {pipeline_mode = #tpu.pipeline_mode<synchronous>, transform_indices = @transform_1, window_bounds = array<i64: 2, 8, 72>}, {pipeline_mode = #tpu.pipeline_mode<synchronous>, transform_indices = @transform_2, window_bounds = array<i64: 2, 8, 1>}, {pipeline_mode = #tpu.pipeline_mode<synchronous>, transform_indices = @transform_3, window_bounds = array<i64: 9, 256>}, {transform_indices = @transform_4, window_bounds = array<i64: 1, 8, 256>}]} {
    %c0 = arith.constant 0 : index
    %c0_0 = arith.constant 0 : index
    %c0_1 = arith.constant 0 : index
    %0 = vector.load %arg1[%c0, %c0_0, %c0_1] : memref<1x8x256xf32, #tpu.memory_space<vmem>>, vector<1x8x256xf32>
    %1 = vector.shape_cast %0 : vector<1x8x256xf32> to vector<8x256xf32>
    %c0_2 = arith.constant 0 : index
    %c0_3 = arith.constant 0 : index
    %c0_4 = arith.constant 0 : index
    %2 = vector.load %arg2[%c0_2, %c0_3, %c0_4] : memref<2x8x72xf32, #tpu.memory_space<vmem>>, vector<1x8x72xf32>
    %3 = vector.shape_cast %2 : vector<1x8x72xf32> to vector<8x72xf32>
    %c17_i32 = arith.constant 17 : i32
    %4 = tpu.dynamic_rotate %1 by %c17_i32 dim 1 : vector<8x256xf32>, i32 -> vector<8x256xf32>
    %c0_5 = arith.constant 0 : index
    %c0_6 = arith.constant 0 : index
    %5 = vector.load %arg4[%c0_5, %c0_6] : memref<9x256xf32, #tpu.memory_space<vmem>>, vector<1x256xf32>
    %6 = vector.broadcast %5 : vector<1x256xf32> to vector<8x256xf32>
    %7 = arith.mulf %4, %6 : vector<8x256xf32>
    %c16_i32 = arith.constant 16 : i32
    %8 = tpu.dynamic_rotate %1 by %c16_i32 dim 1 : vector<8x256xf32>, i32 -> vector<8x256xf32>
    %c1 = arith.constant 1 : index
    %c0_7 = arith.constant 0 : index
    %9 = vector.load %arg4[%c1, %c0_7] : memref<9x256xf32, #tpu.memory_space<vmem>>, vector<1x256xf32>
    %10 = vector.broadcast %9 : vector<1x256xf32> to vector<8x256xf32>
    %11 = arith.mulf %8, %10 : vector<8x256xf32>
    %c15_i32 = arith.constant 15 : i32
    %12 = tpu.dynamic_rotate %1 by %c15_i32 dim 1 : vector<8x256xf32>, i32 -> vector<8x256xf32>
    %c2 = arith.constant 2 : index
    %c0_8 = arith.constant 0 : index
    %13 = vector.load %arg4[%c2, %c0_8] : memref<9x256xf32, #tpu.memory_space<vmem>>, vector<1x256xf32>
    %14 = vector.broadcast %13 : vector<1x256xf32> to vector<8x256xf32>
    %15 = arith.mulf %12, %14 : vector<8x256xf32>
    %c1_i32 = arith.constant 1 : i32
    %16 = tpu.dynamic_rotate %1 by %c1_i32 dim 1 : vector<8x256xf32>, i32 -> vector<8x256xf32>
    %c3 = arith.constant 3 : index
    %c0_9 = arith.constant 0 : index
    %17 = vector.load %arg4[%c3, %c0_9] : memref<9x256xf32, #tpu.memory_space<vmem>>, vector<1x256xf32>
    %18 = vector.broadcast %17 : vector<1x256xf32> to vector<8x256xf32>
    %19 = arith.mulf %16, %18 : vector<8x256xf32>
    %c255_i32 = arith.constant 255 : i32
    %20 = tpu.dynamic_rotate %1 by %c255_i32 dim 1 : vector<8x256xf32>, i32 -> vector<8x256xf32>
    %c5 = arith.constant 5 : index
    %c0_10 = arith.constant 0 : index
    %21 = vector.load %arg4[%c5, %c0_10] : memref<9x256xf32, #tpu.memory_space<vmem>>, vector<1x256xf32>
    %22 = vector.broadcast %21 : vector<1x256xf32> to vector<8x256xf32>
    %23 = arith.mulf %20, %22 : vector<8x256xf32>
    %c241_i32 = arith.constant 241 : i32
    %24 = tpu.dynamic_rotate %1 by %c241_i32 dim 1 : vector<8x256xf32>, i32 -> vector<8x256xf32>
    %c6 = arith.constant 6 : index
    %c0_11 = arith.constant 0 : index
    %25 = vector.load %arg4[%c6, %c0_11] : memref<9x256xf32, #tpu.memory_space<vmem>>, vector<1x256xf32>
    %26 = vector.broadcast %25 : vector<1x256xf32> to vector<8x256xf32>
    %27 = arith.mulf %24, %26 : vector<8x256xf32>
    %c240_i32 = arith.constant 240 : i32
    %28 = tpu.dynamic_rotate %1 by %c240_i32 dim 1 : vector<8x256xf32>, i32 -> vector<8x256xf32>
    %c7 = arith.constant 7 : index
    %c0_12 = arith.constant 0 : index
    %29 = vector.load %arg4[%c7, %c0_12] : memref<9x256xf32, #tpu.memory_space<vmem>>, vector<1x256xf32>
    %30 = vector.broadcast %29 : vector<1x256xf32> to vector<8x256xf32>
    %31 = arith.mulf %28, %30 : vector<8x256xf32>
    %c239_i32 = arith.constant 239 : i32
    %32 = tpu.dynamic_rotate %1 by %c239_i32 dim 1 : vector<8x256xf32>, i32 -> vector<8x256xf32>
    %c8 = arith.constant 8 : index
    %c0_13 = arith.constant 0 : index
    %33 = vector.load %arg4[%c8, %c0_13] : memref<9x256xf32, #tpu.memory_space<vmem>>, vector<1x256xf32>
    %34 = vector.broadcast %33 : vector<1x256xf32> to vector<8x256xf32>
    %35 = arith.mulf %32, %34 : vector<8x256xf32>
    %36 = tpu.concatenate %7, %11, %15, %19, %1, %23, %27, %31, %35 in 0 : vector<8x256xf32>, vector<8x256xf32>, vector<8x256xf32>, vector<8x256xf32>, vector<8x256xf32>, vector<8x256xf32>, vector<8x256xf32>, vector<8x256xf32>, vector<8x256xf32> -> vector<72x256xf32>
    %cst = arith.constant dense<0.000000e+00> : vector<8x256xf32>
    %37 = tpu.matmul %3, %36, %cst {dimension_numbers = #tpu.dot_dimension_numbers<[1], [0], [0], [1], [0, 0, 1, 1], [], []>} : vector<8x72xf32>, vector<72x256xf32>, vector<8x256xf32> -> vector<8x256xf32>
    %c0_14 = arith.constant 0 : index
    %c0_15 = arith.constant 0 : index
    %c0_16 = arith.constant 0 : index
    %38 = vector.load %arg3[%c0_14, %c0_15, %c0_16] : memref<2x8x1xf32, #tpu.memory_space<vmem>>, vector<1x8x1xf32>
    %39 = vector.shape_cast %38 : vector<1x8x1xf32> to vector<8x1xf32>
    %40 = vector.broadcast %39 : vector<8x1xf32> to vector<8x256xf32>
    %41 = arith.addf %37, %40 : vector<8x256xf32>
    %cst_17 = arith.constant 0.000000e+00 : f32
    %42 = vector.broadcast %cst_17 : f32 to vector<8x256xf32>
    %43 = arith.maximumf %41, %42 : vector<8x256xf32>
    %c1_18 = arith.constant 1 : index
    %c0_19 = arith.constant 0 : index
    %c0_20 = arith.constant 0 : index
    %44 = vector.load %arg2[%c1_18, %c0_19, %c0_20] : memref<2x8x72xf32, #tpu.memory_space<vmem>>, vector<1x8x72xf32>
    %45 = vector.shape_cast %44 : vector<1x8x72xf32> to vector<8x72xf32>
    %c17_i32_21 = arith.constant 17 : i32
    %46 = tpu.dynamic_rotate %43 by %c17_i32_21 dim 1 : vector<8x256xf32>, i32 -> vector<8x256xf32>
    %c0_22 = arith.constant 0 : index
    %c0_23 = arith.constant 0 : index
    %47 = vector.load %arg4[%c0_22, %c0_23] : memref<9x256xf32, #tpu.memory_space<vmem>>, vector<1x256xf32>
    %48 = vector.broadcast %47 : vector<1x256xf32> to vector<8x256xf32>
    %49 = arith.mulf %46, %48 : vector<8x256xf32>
    %c16_i32_24 = arith.constant 16 : i32
    %50 = tpu.dynamic_rotate %43 by %c16_i32_24 dim 1 : vector<8x256xf32>, i32 -> vector<8x256xf32>
    %c1_25 = arith.constant 1 : index
    %c0_26 = arith.constant 0 : index
    %51 = vector.load %arg4[%c1_25, %c0_26] : memref<9x256xf32, #tpu.memory_space<vmem>>, vector<1x256xf32>
    %52 = vector.broadcast %51 : vector<1x256xf32> to vector<8x256xf32>
    %53 = arith.mulf %50, %52 : vector<8x256xf32>
    %c15_i32_27 = arith.constant 15 : i32
    %54 = tpu.dynamic_rotate %43 by %c15_i32_27 dim 1 : vector<8x256xf32>, i32 -> vector<8x256xf32>
    %c2_28 = arith.constant 2 : index
    %c0_29 = arith.constant 0 : index
    %55 = vector.load %arg4[%c2_28, %c0_29] : memref<9x256xf32, #tpu.memory_space<vmem>>, vector<1x256xf32>
    %56 = vector.broadcast %55 : vector<1x256xf32> to vector<8x256xf32>
    %57 = arith.mulf %54, %56 : vector<8x256xf32>
    %c1_i32_30 = arith.constant 1 : i32
    %58 = tpu.dynamic_rotate %43 by %c1_i32_30 dim 1 : vector<8x256xf32>, i32 -> vector<8x256xf32>
    %c3_31 = arith.constant 3 : index
    %c0_32 = arith.constant 0 : index
    %59 = vector.load %arg4[%c3_31, %c0_32] : memref<9x256xf32, #tpu.memory_space<vmem>>, vector<1x256xf32>
    %60 = vector.broadcast %59 : vector<1x256xf32> to vector<8x256xf32>
    %61 = arith.mulf %58, %60 : vector<8x256xf32>
    %c255_i32_33 = arith.constant 255 : i32
    %62 = tpu.dynamic_rotate %43 by %c255_i32_33 dim 1 : vector<8x256xf32>, i32 -> vector<8x256xf32>
    %c5_34 = arith.constant 5 : index
    %c0_35 = arith.constant 0 : index
    %63 = vector.load %arg4[%c5_34, %c0_35] : memref<9x256xf32, #tpu.memory_space<vmem>>, vector<1x256xf32>
    %64 = vector.broadcast %63 : vector<1x256xf32> to vector<8x256xf32>
    %65 = arith.mulf %62, %64 : vector<8x256xf32>
    %c241_i32_36 = arith.constant 241 : i32
    %66 = tpu.dynamic_rotate %43 by %c241_i32_36 dim 1 : vector<8x256xf32>, i32 -> vector<8x256xf32>
    %c6_37 = arith.constant 6 : index
    %c0_38 = arith.constant 0 : index
    %67 = vector.load %arg4[%c6_37, %c0_38] : memref<9x256xf32, #tpu.memory_space<vmem>>, vector<1x256xf32>
    %68 = vector.broadcast %67 : vector<1x256xf32> to vector<8x256xf32>
    %69 = arith.mulf %66, %68 : vector<8x256xf32>
    %c240_i32_39 = arith.constant 240 : i32
    %70 = tpu.dynamic_rotate %43 by %c240_i32_39 dim 1 : vector<8x256xf32>, i32 -> vector<8x256xf32>
    %c7_40 = arith.constant 7 : index
    %c0_41 = arith.constant 0 : index
    %71 = vector.load %arg4[%c7_40, %c0_41] : memref<9x256xf32, #tpu.memory_space<vmem>>, vector<1x256xf32>
    %72 = vector.broadcast %71 : vector<1x256xf32> to vector<8x256xf32>
    %73 = arith.mulf %70, %72 : vector<8x256xf32>
    %c239_i32_42 = arith.constant 239 : i32
    %74 = tpu.dynamic_rotate %43 by %c239_i32_42 dim 1 : vector<8x256xf32>, i32 -> vector<8x256xf32>
    %c8_43 = arith.constant 8 : index
    %c0_44 = arith.constant 0 : index
    %75 = vector.load %arg4[%c8_43, %c0_44] : memref<9x256xf32, #tpu.memory_space<vmem>>, vector<1x256xf32>
    %76 = vector.broadcast %75 : vector<1x256xf32> to vector<8x256xf32>
    %77 = arith.mulf %74, %76 : vector<8x256xf32>
    %78 = tpu.concatenate %49, %53, %57, %61, %43, %65, %69, %73, %77 in 0 : vector<8x256xf32>, vector<8x256xf32>, vector<8x256xf32>, vector<8x256xf32>, vector<8x256xf32>, vector<8x256xf32>, vector<8x256xf32>, vector<8x256xf32>, vector<8x256xf32> -> vector<72x256xf32>
    %cst_45 = arith.constant dense<0.000000e+00> : vector<8x256xf32>
    %79 = tpu.matmul %45, %78, %cst_45 {dimension_numbers = #tpu.dot_dimension_numbers<[1], [0], [0], [1], [0, 0, 1, 1], [], []>} : vector<8x72xf32>, vector<72x256xf32>, vector<8x256xf32> -> vector<8x256xf32>
    %c1_46 = arith.constant 1 : index
    %c0_47 = arith.constant 0 : index
    %c0_48 = arith.constant 0 : index
    %80 = vector.load %arg3[%c1_46, %c0_47, %c0_48] : memref<2x8x1xf32, #tpu.memory_space<vmem>>, vector<1x8x1xf32>
    %81 = vector.shape_cast %80 : vector<1x8x1xf32> to vector<8x1xf32>
    %82 = vector.broadcast %81 : vector<8x1xf32> to vector<8x256xf32>
    %83 = arith.addf %79, %82 : vector<8x256xf32>
    %84 = arith.addf %83, %1 : vector<8x256xf32>
    %c0_49 = arith.constant 0 : index
    %c0_50 = arith.constant 0 : index
    %c0_51 = arith.constant 0 : index
    %85 = vector.load %arg5[%c0_49, %c0_50, %c0_51] : memref<1x8x256xf32, #tpu.memory_space<vmem>>, vector<1x8x256xf32>
    %86 = vector.shape_cast %85 : vector<1x8x256xf32> to vector<8x256xf32>
    %87 = vector.shape_cast %84 : vector<8x256xf32> to vector<1x8x256xf32>
    tpu.vector_store %arg5[%c0_49, %c0_50, %c0_51], %87 {strides = array<i32>} : memref<1x8x256xf32, #tpu.memory_space<vmem>>, vector<1x8x256xf32>,
    return
  }
  func.func @transform_0(%arg0: i32) -> (i32, i32, i32) {
    %c0_i32 = arith.constant 0 : i32
    %c0_i32_0 = arith.constant 0 : i32
    %c0_i32_1 = arith.constant 0 : i32
    return %arg0, %c0_i32, %c0_i32_0 : i32, i32, i32
  }
  func.func @transform_1(%arg0: i32) -> (i32, i32, i32) {
    %c0_i32 = arith.constant 0 : i32
    %c0_i32_0 = arith.constant 0 : i32
    %c0_i32_1 = arith.constant 0 : i32
    %c0_i32_2 = arith.constant 0 : i32
    return %c0_i32, %c0_i32_0, %c0_i32_1 : i32, i32, i32
  }
  func.func @transform_2(%arg0: i32) -> (i32, i32, i32) {
    %c0_i32 = arith.constant 0 : i32
    %c0_i32_0 = arith.constant 0 : i32
    %c0_i32_1 = arith.constant 0 : i32
    %c0_i32_2 = arith.constant 0 : i32
    return %c0_i32, %c0_i32_0, %c0_i32_1 : i32, i32, i32
  }
  func.func @transform_3(%arg0: i32) -> (i32, i32) {
    %c0_i32 = arith.constant 0 : i32
    %c0_i32_0 = arith.constant 0 : i32
    %c0_i32_1 = arith.constant 0 : i32
    return %c0_i32, %c0_i32_0 : i32, i32
  }
  func.func @transform_4(%arg0: i32) -> (i32, i32, i32) {
    %c0_i32 = arith.constant 0 : i32
    %c0_i32_0 = arith.constant 0 : i32
    %c0_i32_1 = arith.constant 0 : i32
    return %arg0, %c0_i32, %c0_i32_0 : i32, i32, i32
  }
}

</mosaic_0001>

<llo_original>
// kernel: tpu_custom_call.1
$region0: #{tpu_custom_call.1}
  #allocation0 [shape = 'u32[]', space=smem, size = 0x4, offset = 0x4, fixed_abs, tag = 'smem constant byte address 0x4 - core index']
  #allocation1 [shape = 'u32[72,128]{1,0:T(1,128)}', space=vmem, size = 0x9000, scoped, tag = 'internal scratch']
  %s0 = inlined_call_operand.hbm [shape: f32[2,8,256], index: 0, kind: input, shape index: {}]
  %s1 = inlined_call_operand.vmem [shape: f32[2,8,72], index: 1, kind: input, shape index: {}]
  %s2 = inlined_call_operand.vmem [shape: f32[2,8,1], index: 2, kind: input, shape index: {}]
  %s3 = inlined_call_operand.hbm [shape: f32[9,256], index: 3, kind: input, shape index: {}]
  %s4 = inlined_call_operand.hbm [shape: f32[2,8,256], index: 4, kind: output, shape index: {}]
  %s5 = sld [smem:[#allocation0]]
  $region57: #{tpu_custom_call.1} parent=0
    _
  %s7 = ssub.s32 1, %s5
  %s8 = scalar_select 0, %s7, %s5
  $region1: #{tpu_custom_call.1} parent=0
    #allocation2 [shape = 'u8[16384]{0}', space=vmem, size = 0x4000, scoped, tag = 'input window, operand 0']
    #allocation3 [shape = 's32[2]{0}', space=sflag, size = 0x8, scoped, tag = 'scoped memory for tpu_custom_call.1']
    #allocation4 [shape = 's32[2]{0}', space=sflag, size = 0x8, scoped, tag = 'scoped memory for tpu_custom_call.1']
    #allocation5 [shape = 'u8[16384]{0}', space=vmem, size = 0x4000, scoped, tag = 'input window, operand 3, single buffered']
    #allocation6 [shape = 's32[1]{0}', space=sflag, size = 0x4, scoped, tag = 'scoped memory for tpu_custom_call.1']
    #allocation7 [shape = 'u8[16384]{0}', space=vmem, size = 0x4000, scoped, tag = 'output window, operand 0']
    %9 = vsyncpa [#allocation3], 0
    %s10 = scalar_lea.sflag [#allocation3], 1
    %11 = vsyncpa %s10, 0
    %12 = vsyncpa [#allocation6], 0
    %13 = vsyncpa [#allocation4], 0
    %s14 = scalar_lea.sflag [#allocation4], 1
    %15 = vsyncpa %s14, 0
    loop: start=0, step=1, limit=4
    $region2: #{tpu_custom_call.1} parent=1 // loop_pre_header
      _
    $region3: #{tpu_custom_call.1} parent=1 // loop_header
      %s17 = sphi 0, %s21
      %p18 = scmp.ge.s32.totalorder %s17, 4
      %s27 = sphi 0, %s29
      %s30 = sphi 0, %s27
      %s31 = sphi 0, %s30
      %s47 = sphi 0, %s31
      %s51 = sphi 0, %s51
      %s53 = sphi 0, %s51
      %s54 = sphi 0, %s53
      %s68 = sphi 0, %s54
      %s72 = sphi 0, %s72
      %s74 = sphi 0, %s72
      %s75 = sphi 0, %s74
      %s89 = sphi 0, %s75
      %s93 = sphi 0, %s93
      %s95 = sphi 0, %s93
      %s96 = sphi 0, %s95
      %s110 = sphi 0, %s96
      %s116 = sphi 0, %s118
      %s119 = sphi 0, %s116
      %s120 = sphi 0, %s119
      %s136 = sphi 0, %s120
    $region4: #{tpu_custom_call.1} parent=1 // loop_header_branch
      %20 = sbr.rel (%p18) target = $region8
    $region5: #{tpu_custom_call.1} parent=1 // loop_body
      %s22 = ssub.s32 %s17, 1
      %s23 = ssub.s32 %s17, 2
      %s24 = sadd.s32 %s17, 1
      %s25 = ssub.s32 %s17, %s24
      %p26 = scmp.eq.s32.totalorder %s25, 0
      %s28 = sadd.s32 %s27, 1
      %s29 = scalar_select %p26, %s27, %s28
      %p32 = pneg %p26
      %p33 = scmp.eq.s32.totalorder %s17, 1
      %p34 = por %p32, %p33
      %p35 = scmp.ne.s32.totalorder %s27, %s30
      %p36 = scmp.eq.s32.totalorder %s17, 0
      %p37 = por %p35, %p36
      %p38 = scmp.ne.s32.totalorder %s27, %s30
      %p39 = scmp.eq.s32.totalorder %s22, 1
      %p40 = por %p38, %p39
      %p41 = scmp.ne.s32.totalorder %s30, %s31
      %p42 = scmp.eq.s32.totalorder %s22, 0
      %p43 = por %p41, %p42
      %p44 = scmp.ne.s32.totalorder %s30, %s31
      %p45 = scmp.eq.s32.totalorder %s23, 1
      %p46 = por %p44, %p45
      %p48 = scmp.ne.s32.totalorder %s31, %s47
      %p49 = scmp.eq.s32.totalorder %s23, 0
      %p50 = por %p48, %p49
      %s52 = sadd.s32 %s51, 1
      %p55 = scmp.eq.s32.totalorder %s17, 1
      %p56 = scmp.ne.s32.totalorder %s51, %s53
      %p57 = scmp.eq.s32.totalorder %s17, 0
      %p58 = por %p56, %p57
      %p59 = scmp.ne.s32.totalorder %s51, %s53
      %p60 = scmp.eq.s32.totalorder %s22, 1
      %p61 = por %p59, %p60
      %p62 = scmp.ne.s32.totalorder %s53, %s54
      %p63 = scmp.eq.s32.totalorder %s22, 0
      %p64 = por %p62, %p63
      %p65 = scmp.ne.s32.totalorder %s53, %s54
      %p66 = scmp.eq.s32.totalorder %s23, 1
      %p67 = por %p65, %p66
      %p69 = scmp.ne.s32.totalorder %s54, %s68
      %p70 = scmp.eq.s32.totalorder %s23, 0
      %p71 = por %p69, %p70
      %s73 = sadd.s32 %s72, 1
      %p76 = scmp.eq.s32.totalorder %s17, 1
      %p77 = scmp.ne.s32.totalorder %s72, %s74
      %p78 = scmp.eq.s32.totalorder %s17, 0
      %p79 = por %p77, %p78
      %p80 = scmp.ne.s32.totalorder %s72, %s74
      %p81 = scmp.eq.s32.totalorder %s22, 1
      %p82 = por %p80, %p81
      %p83 = scmp.ne.s32.totalorder %s74, %s75
      %p84 = scmp.eq.s32.totalorder %s22, 0
      %p85 = por %p83, %p84
      %p86 = scmp.ne.s32.totalorder %s74, %s75
      %p87 = scmp.eq.s32.totalorder %s23, 1
      %p88 = por %p86, %p87
      %p90 = scmp.ne.s32.totalorder %s75, %s89
      %p91 = scmp.eq.s32.totalorder %s23, 0
      %p92 = por %p90, %p91
      %s94 = sadd.s32 %s93, 1
      %p97 = scmp.eq.s32.totalorder %s17, 1
      %p98 = scmp.ne.s32.totalorder %s93, %s95
      %p99 = scmp.eq.s32.totalorder %s17, 0
      %p100 = por %p98, %p99
      %p101 = scmp.ne.s32.totalorder %s93, %s95
      %p102 = scmp.eq.s32.totalorder %s22, 1
      %p103 = por %p101, %p102
      %p104 = scmp.ne.s32.totalorder %s95, %s96
      %p105 = scmp.eq.s32.totalorder %s22, 0
      %p106 = por %p104, %p105
      %p107 = scmp.ne.s32.totalorder %s95, %s96
      %p108 = scmp.eq.s32.totalorder %s23, 1
      %p109 = por %p107, %p108
      %p111 = scmp.ne.s32.totalorder %s96, %s110
      %p112 = scmp.eq.s32.totalorder %s23, 0
      %p113 = por %p111, %p112
      %s114 = ssub.s32 %s17, %s24
      %p115 = scmp.eq.s32.totalorder %s114, 0
      %s117 = sadd.s32 %s116, 1
      %s118 = scalar_select %p115, %s116, %s117
      %p121 = pneg %p115
      %p122 = scmp.eq.s32.totalorder %s17, 1
      %p123 = por %p121, %p122
      %p124 = scmp.ne.s32.totalorder %s116, %s119
      %p125 = scmp.eq.s32.totalorder %s17, 0
      %p126 = por %p124, %p125
      %p127 = scmp.ne.s32.totalorder %s116, %s119
      %p128 = scmp.eq.s32.totalorder %s22, 1
      %p129 = por %p127, %p128
      %p130 = scmp.ne.s32.totalorder %s119, %s120
      %p131 = scmp.eq.s32.totalorder %s22, 0
      %p132 = por %p130, %p131
      %p133 = scmp.ne.s32.totalorder %s119, %s120
      %p134 = scmp.eq.s32.totalorder %s23, 1
      %p135 = por %p133, %p134
      %p137 = scmp.ne.s32.totalorder %s120, %s136
      %p138 = scmp.eq.s32.totalorder %s23, 0
      %p139 = por %p137, %p138
      %p140 = scmp.le.s32.totalorder 1, %s17
      %p141 = scmp.lt.s32.totalorder %s17, 3
      %p142 = pnand %p140, %p141
      %p143 = pneg %p142
      // Predicated region
      $region9: #{tpu_custom_call.1} parent=5 // pred_check
        _
      $region10: #{tpu_custom_call.1} parent=5 // pred_check_branch
        %145 = sbr.rel (%p142) target = $region12
      $region11: #{tpu_custom_call.1} parent=5 // pred_region
        %s146 = ssub.s32 %s17, 1
        // Predicated region
        $region13: #{tpu_custom_call.1} parent=11 // pred_check
          %p147 = pneg %p64
        $region14: #{tpu_custom_call.1} parent=11 // pred_check_branch
          %149 = sbr.rel (%p147) target = $region16
        $region15: #{tpu_custom_call.1} parent=11 // pred_region
          _
        $region16: #{tpu_custom_call.1} parent=11 // pred_fallthru
          _
        // Predicated region
        $region17: #{tpu_custom_call.1} parent=11 // pred_check
          %p150 = pneg %p85
        $region18: #{tpu_custom_call.1} parent=11 // pred_check_branch
          %152 = sbr.rel (%p150) target = $region20
        $region19: #{tpu_custom_call.1} parent=11 // pred_region
          _
        $region20: #{tpu_custom_call.1} parent=11 // pred_fallthru
          _
        // Predicated region
        $region21: #{tpu_custom_call.1} parent=11 // pred_check
          %p153 = pneg %p106
        $region22: #{tpu_custom_call.1} parent=11 // pred_check_branch
          %155 = sbr.rel (%p153) target = $region24
        $region23: #{tpu_custom_call.1} parent=11 // pred_region
          %157 = vsyncadd [#allocation6], 0
          %s158 = sshll.u32 %s3, 4
          %s159 = int_to_ptr.hbm [resolvable:$true] %s158
          %s160 = sshll.u32 [#allocation5], 4
          %s161 = int_to_ptr.vmem [resolvable:$true] %s160
          %166 = dma.hbm_to_vmem [thread:$0]  %s159, 512, %s161, [#allocation6], 256, 256, 16
        $region24: #{tpu_custom_call.1} parent=11 // pred_fallthru
          _
      $region12: #{tpu_custom_call.1} parent=5 // pred_fallthru
        _
      %p167 = scmp.lt.s32.totalorder %s17, 2
      // Predicated region
      $region25: #{tpu_custom_call.1} parent=5 // pred_check
        %p168 = pneg %p167
      $region26: #{tpu_custom_call.1} parent=5 // pred_check_branch
        %170 = sbr.rel (%p168) target = $region28
      $region27: #{tpu_custom_call.1} parent=5 // pred_region
        // Predicated region
        $region29: #{tpu_custom_call.1} parent=27 // pred_check
          %p171 = pneg %p37
        $region30: #{tpu_custom_call.1} parent=27 // pred_check_branch
          %173 = sbr.rel (%p171) target = $region32
        $region31: #{tpu_custom_call.1} parent=27 // pred_region
          %s174 = sand.u32 %s27, 1
          %s175 = scalar_lea.sflag [#allocation3], %s174
          %s176 = sand.u32 %s27, 1
          %s177 = smul.addr %s176, 16
          %s178 = scalar_lea.vmem [#allocation2], %s177
          %180 = vsyncadd %s175, 0
          %s181 = smul.addr %s17, 2
          %s182 = smul.addr %s181, 8
          %s183 = scalar_lea.hbm %s0, %s182
          %s185 = sshll.u32 %s183, 4
          %s186 = int_to_ptr.hbm [resolvable:$true] %s185
          %s187 = sshll.u32 %s178, 4
          %s188 = int_to_ptr.vmem [resolvable:$true] %s187
          %190 = dma.hbm_to_vmem [thread:$0]  %s186, 256, %s188, %s175
        $region32: #{tpu_custom_call.1} parent=27 // pred_fallthru
          _
      $region28: #{tpu_custom_call.1} parent=5 // pred_fallthru
        _
      %p191 = scmp.le.s32.totalorder 1, %s17
      %p192 = scmp.lt.s32.totalorder %s17, 3
      %p193 = pnand %p191, %p192
      %p194 = pneg %p193
      // Predicated region
      $region33: #{tpu_custom_call.1} parent=5 // pred_check
        _
      $region34: #{tpu_custom_call.1} parent=5 // pred_check_branch
        %196 = sbr.rel (%p193) target = $region36
      $region35: #{tpu_custom_call.1} parent=5 // pred_region
        %s197 = ssub.s32 %s17, 1
        %s198 = sand.u32 %s30, 1
        %s199 = scalar_lea.sflag [#allocation3], %s198
        %s200 = sand.u32 %s30, 1
        %s201 = smul.addr %s200, 16
        %s202 = scalar_lea.vmem [#allocation2], %s201
        // Predicated region
        $region37: #{tpu_custom_call.1} parent=35 // pred_check
          %p203 = pneg %p43
        $region38: #{tpu_custom_call.1} parent=35 // pred_check_branch
          %205 = sbr.rel (%p203) target = $region40
        $region39: #{tpu_custom_call.1} parent=35 // pred_region
          %207 = dma.done %s199, 256
        $region40: #{tpu_custom_call.1} parent=35 // pred_fallthru
          _
        // Predicated region
        $region41: #{tpu_custom_call.1} parent=35 // pred_check
          %p208 = pneg %p106
        $region42: #{tpu_custom_call.1} parent=35 // pred_check_branch
          %210 = sbr.rel (%p208) target = $region44
        $region43: #{tpu_custom_call.1} parent=35 // pred_region
          %212 = dma.done [#allocation6], 512
        $region44: #{tpu_custom_call.1} parent=35 // pred_fallthru
          _
        %s213 = sand.u32 %s30, 1
        %s214 = scalar_lea.sflag [#allocation3], %s213
        %s215 = sand.u32 %s30, 1
        %s216 = smul.addr %s215, 16
        %s217 = scalar_lea.vmem [#allocation2], %s216
        %p218 = pneg %p43
        %p219 = pneg %p40
        %p220 = pneg %p64
        %p221 = pneg %p61
        %p222 = pneg %p85
        %p223 = pneg %p82
        %p224 = pneg %p106
        %p225 = pneg %p103
        %p226 = pneg %p132
        %p227 = pneg %p129
        %s228 = sand.u32 %s119, 1
        %s229 = scalar_lea.sflag [#allocation4], %s228
        %s230 = sand.u32 %s119, 1
        %s231 = smul.addr %s230, 16
        %s232 = scalar_lea.vmem [#allocation7], %s231
        %v233 = vld [vmem:[%s202] sm:$0xff]
        %v234 = vld [vmem:[%s202 + $0x8] sm:$0xff]
        %v235 = vld [vmem:[%s1] sm:$0xff]
        %236 = vrot.lane.b32.xlu0 %v233, 17
        %v237 = vpop.permute.xlu0 %236
        %238 = vrot.lane.b32.xlu0 %v234, 17
        %v239 = vpop.permute.xlu0 %238
        %v240 = vlaneseq
        %v241 = vand.u32 %v240, 127
        %vm242 = vcmp.lt.s32.totalorder %v241, 17
        %v243 = vsel %vm242, %v237, %v239
        %v244 = vsel %vm242, %v239, %v237
        %v245 = vld [vmem:[#allocation5] ss:$8 sm:$0x3]
        %v247 = vperm.slane %v245, 0
        %v248 = vperm.slane %v245, 1
        %v251 = vmul.f32 %v244, %v247
        %v252 = vmul.f32 %v243, %v248
        %253 = vrot.lane.b32.xlu0 %v233, 16
        %v254 = vpop.permute.xlu0 %253
        %255 = vrot.lane.b32.xlu0 %v234, 16
        %v256 = vpop.permute.xlu0 %255
        %vm257 = vcmp.lt.s32.totalorder %v241, 16
        %v258 = vsel %vm257, %v254, %v256
        %v259 = vsel %vm257, %v256, %v254
        %s260 = scalar_lea.vmem [#allocation5], 1
        %v261 = vld [vmem:[%s260] ss:$8 sm:$0x3]
        %v263 = vperm.slane %v261, 0
        %v264 = vperm.slane %v261, 1
        %v267 = vmul.f32 %v259, %v263
        %v268 = vmul.f32 %v258, %v264
        %269 = vrot.lane.b32.xlu0 %v233, 15
        %v270 = vpop.permute.xlu0 %269
        %271 = vrot.lane.b32.xlu0 %v234, 15
        %v272 = vpop.permute.xlu0 %271
        %vm273 = vcmp.lt.s32.totalorder %v241, 15
        %v274 = vsel %vm273, %v270, %v272
        %v275 = vsel %vm273, %v272, %v270
        %s276 = scalar_lea.vmem [#allocation5], 2
        %v277 = vld [vmem:[%s276] ss:$8 sm:$0x3]
        %v279 = vperm.slane %v277, 0
        %v280 = vperm.slane %v277, 1
        %v283 = vmul.f32 %v275, %v279
        %v284 = vmul.f32 %v274, %v280
        %285 = vrot.lane.b32.xlu0 %v233, 1
        %v286 = vpop.permute.xlu0 %285
        %287 = vrot.lane.b32.xlu0 %v234, 1
        %v288 = vpop.permute.xlu0 %287
        %vm289 = vcmp.lt.s32.totalorder %v241, 1
        %v290 = vsel %vm289, %v286, %v288
        %v291 = vsel %vm289, %v288, %v286
        %s292 = scalar_lea.vmem [#allocation5], 3
        %v293 = vld [vmem:[%s292] ss:$8 sm:$0x3]
        %v295 = vperm.slane %v293, 0
        %v296 = vperm.slane %v293, 1
        %v299 = vmul.f32 %v291, %v295
        %v300 = vmul.f32 %v290, %v296
        %301 = vrot.lane.b32.xlu0 %v233, 127
        %v302 = vpop.permute.xlu0 %301
        %303 = vrot.lane.b32.xlu0 %v234, 127
        %v304 = vpop.permute.xlu0 %303
        %vm305 = vcmp.lt.s32.totalorder %v241, 127
        %v306 = vsel %vm305, %v302, %v304
        %v307 = vsel %vm305, %v304, %v302
        %s308 = scalar_lea.vmem [#allocation5], 5
        %v309 = vld [vmem:[%s308] ss:$8 sm:$0x3]
        %v311 = vperm.slane %v309, 0
        %v312 = vperm.slane %v309, 1
        %v315 = vmul.f32 %v306, %v311
        %v316 = vmul.f32 %v307, %v312
        %317 = vrot.lane.b32.xlu0 %v233, 113
        %v318 = vpop.permute.xlu0 %317
        %319 = vrot.lane.b32.xlu0 %v234, 113
        %v320 = vpop.permute.xlu0 %319
        %vm321 = vcmp.lt.s32.totalorder %v241, 113
        %v322 = vsel %vm321, %v318, %v320
        %v323 = vsel %vm321, %v320, %v318
        %s324 = scalar_lea.vmem [#allocation5], 6
        %v325 = vld [vmem:[%s324] ss:$8 sm:$0x3]
        %v327 = vperm.slane %v325, 0
        %v328 = vperm.slane %v325, 1
        %v331 = vmul.f32 %v322, %v327
        %v332 = vmul.f32 %v323, %v328
        %333 = vrot.lane.b32.xlu0 %v233, 112
        %v334 = vpop.permute.xlu0 %333
        %335 = vrot.lane.b32.xlu0 %v234, 112
        %v336 = vpop.permute.xlu0 %335
        %vm337 = vcmp.lt.s32.totalorder %v241, 112
        %v338 = vsel %vm337, %v334, %v336
        %v339 = vsel %vm337, %v336, %v334
        %s340 = scalar_lea.vmem [#allocation5], 7
        %v341 = vld [vmem:[%s340] ss:$8 sm:$0x3]
        %v343 = vperm.slane %v341, 0
        %v344 = vperm.slane %v341, 1
        %v347 = vmul.f32 %v338, %v343
        %v348 = vmul.f32 %v339, %v344
        %349 = vrot.lane.b32.xlu0 %v233, 111
        %v350 = vpop.permute.xlu0 %349
        %351 = vrot.lane.b32.xlu0 %v234, 111
        %v352 = vpop.permute.xlu0 %351
        %vm353 = vcmp.lt.s32.totalorder %v241, 111
        %v354 = vsel %vm353, %v350, %v352
        %v355 = vsel %vm353, %v352, %v350
        %s356 = scalar_lea.vmem [#allocation5], 16
        %v357 = vld [vmem:[%s356] ss:$8 sm:$0x3]
        %v359 = vperm.slane %v357, 0
        %v360 = vperm.slane %v357, 1
        %v363 = vmul.f32 %v354, %v359
        %v364 = vmul.f32 %v355, %v360
        %v365 = vld [vmem:[%s2] sm:$0xff]
        %367 = vset.pattern.permute.xlu0 0
        %368 = vperm.xlu0 %367, %v365
        %v369 = vpop.permute.xlu0 %368
        %vm371 = vcmask 588800
        %v373 = vsel %vm371, %v235, 0
        %375 = vmatpush.msra.mxu0 0.0
        %376 = vmatpush.msra.mxu0 0.0
        %377 = vmatpush.msra.mxu0 0.0
        %378 = vmatpush.msra.mxu0 0.0
        %379 = vmatpush.msra.mxu0 0.0
        %380 = vmatpush.msra.mxu0 0.0
        %381 = vmatpush.msra.mxu0 0.0
        %382 = vmatpush.msra.mxu0 %v363
        %383 = vmatpush.msra.mxu0 %v347
        %384 = vmatpush.msra.mxu0 %v331
        %385 = vmatpush.msra.mxu0 %v315
        %386 = vmatpush.msra.mxu0 %v233
        %387 = vmatpush.msra.mxu0 %v299
        %388 = vmatpush.msra.mxu0 %v283
        %389 = vmatpush.msra.mxu0 %v267
        %390 = vmatpush.msra.mxu0 %v251
        %391 = vmatmul.f32.gmra.mxu0 %v373
        %v392 = vpop.f32.mrf.mxu0
        %v393 = vadd.f32 %v369, %v392
        %394 = vdwg.mxu0
        %395 = vmatpush.msra.mxu0 0.0
        %396 = vmatpush.msra.mxu0 0.0
        %397 = vmatpush.msra.mxu0 0.0
        %398 = vmatpush.msra.mxu0 0.0
        %399 = vmatpush.msra.mxu0 0.0
        %400 = vmatpush.msra.mxu0 0.0
        %401 = vmatpush.msra.mxu0 0.0
        %402 = vmatpush.msra.mxu0 %v364
        %403 = vmatpush.msra.mxu0 %v348
        %404 = vmatpush.msra.mxu0 %v332
        %405 = vmatpush.msra.mxu0 %v316
        %406 = vmatpush.msra.mxu0 %v234
        %407 = vmatpush.msra.mxu0 %v300
        %408 = vmatpush.msra.mxu0 %v284
        %409 = vmatpush.msra.mxu0 %v268
        %410 = vmatpush.msra.mxu0 %v252
        %411 = vmatmul.f32.gmra.mxu0 %v373
        %v412 = vpop.f32.mrf.mxu0
        %v413 = vadd.f32 %v369, %v412
        %414 = vdwg.mxu0
        %v415 = vmax.f32 %v393, 0.0
        %v416 = vmax.f32 %v413, 0.0
        %s417 = scalar_lea.vmem %s1, 8
        %v418 = vld [vmem:[%s417] sm:$0xff]
        %419 = vrot.lane.b32.xlu0 %v415, 17
        %v420 = vpop.permute.xlu0 %419
        %421 = vrot.lane.b32.xlu0 %v416, 17
        %v422 = vpop.permute.xlu0 %421
        %v423 = vsel %vm242, %v420, %v422
        %v424 = vsel %vm242, %v422, %v420
        %v425 = vmul.f32 %v424, %v247
        %v426 = vmul.f32 %v423, %v248
        %427 = vrot.lane.b32.xlu0 %v415, 16
        %v428 = vpop.permute.xlu0 %427
        %429 = vrot.lane.b32.xlu0 %v416, 16
        %v430 = vpop.permute.xlu0 %429
        %v431 = vsel %vm257, %v428, %v430
        %v432 = vsel %vm257, %v430, %v428
        %v433 = vmul.f32 %v432, %v263
        %v434 = vmul.f32 %v431, %v264
        %435 = vrot.lane.b32.xlu0 %v415, 15
        %v436 = vpop.permute.xlu0 %435
        %437 = vrot.lane.b32.xlu0 %v416, 15
        %v438 = vpop.permute.xlu0 %437
        %v439 = vsel %vm273, %v436, %v438
        %v440 = vsel %vm273, %v438, %v436
        %v441 = vmul.f32 %v440, %v279
        %v442 = vmul.f32 %v439, %v280
        %443 = vrot.lane.b32.xlu0 %v415, 1
        %v444 = vpop.permute.xlu0 %443
        %445 = vrot.lane.b32.xlu0 %v416, 1
        %v446 = vpop.permute.xlu0 %445
        %v447 = vsel %vm289, %v444, %v446
        %v448 = vsel %vm289, %v446, %v444
        %v449 = vmul.f32 %v448, %v295
        %v450 = vmul.f32 %v447, %v296
        %451 = vrot.lane.b32.xlu0 %v415, 127
        %v452 = vpop.permute.xlu0 %451
        %453 = vrot.lane.b32.xlu0 %v416, 127
        %v454 = vpop.permute.xlu0 %453
        %v455 = vsel %vm305, %v452, %v454
        %v456 = vsel %vm305, %v454, %v452
        %v457 = vmul.f32 %v455, %v311
        %v458 = vmul.f32 %v456, %v312
        %459 = vrot.lane.b32.xlu0 %v415, 113
        %v460 = vpop.permute.xlu0 %459
        %461 = vrot.lane.b32.xlu0 %v416, 113
        %v462 = vpop.permute.xlu0 %461
        %v463 = vsel %vm321, %v460, %v462
        %v464 = vsel %vm321, %v462, %v460
        %v465 = vmul.f32 %v463, %v327
        %v466 = vmul.f32 %v464, %v328
        %467 = vrot.lane.b32.xlu0 %v415, 112
        %v468 = vpop.permute.xlu0 %467
        %469 = vrot.lane.b32.xlu0 %v416, 112
        %v470 = vpop.permute.xlu0 %469
        %v471 = vsel %vm337, %v468, %v470
        %v472 = vsel %vm337, %v470, %v468
        %v473 = vmul.f32 %v471, %v343
        %v474 = vmul.f32 %v472, %v344
        %475 = vrot.lane.b32.xlu0 %v415, 111
        %v476 = vpop.permute.xlu0 %475
        %477 = vrot.lane.b32.xlu0 %v416, 111
        %v478 = vpop.permute.xlu0 %477
        %v479 = vsel %vm353, %v476, %v478
        %v480 = vsel %vm353, %v478, %v476
        %v481 = vmul.f32 %v479, %v359
        %v482 = vmul.f32 %v480, %v360
        %s483 = scalar_lea.vmem %s2, 8
        %v484 = vld [vmem:[%s483] sm:$0xff]
        %486 = vset.pattern.permute.xlu0 0
        %487 = vperm.xlu0 %486, %v484
        %v488 = vpop.permute.xlu0 %487
        %v491 = vsel %vm371, %v418, 0
        %493 = vmatpush.msra.mxu0 0.0
        %494 = vmatpush.msra.mxu0 0.0
        %495 = vmatpush.msra.mxu0 0.0
        %496 = vmatpush.msra.mxu0 0.0
        %497 = vmatpush.msra.mxu0 0.0
        %498 = vmatpush.msra.mxu0 0.0
        %499 = vmatpush.msra.mxu0 0.0
        %500 = vmatpush.msra.mxu0 %v481
        %501 = vmatpush.msra.mxu0 %v473
        %502 = vmatpush.msra.mxu0 %v465
        %503 = vmatpush.msra.mxu0 %v457
        %504 = vmatpush.msra.mxu0 %v415
        %505 = vmatpush.msra.mxu0 %v449
        %506 = vmatpush.msra.mxu0 %v441
        %507 = vmatpush.msra.mxu0 %v433
        %508 = vmatpush.msra.mxu0 %v425
        %509 = vmatmul.f32.gmra.mxu0 %v491
        %v510 = vpop.f32.mrf.mxu0
        %v511 = vadd.f32 %v488, %v510
        %512 = vdwg.mxu0
        %513 = vmatpush.msra.mxu0 0.0
        %514 = vmatpush.msra.mxu0 0.0
        %515 = vmatpush.msra.mxu0 0.0
        %516 = vmatpush.msra.mxu0 0.0
        %517 = vmatpush.msra.mxu0 0.0
        %518 = vmatpush.msra.mxu0 0.0
        %519 = vmatpush.msra.mxu0 0.0
        %520 = vmatpush.msra.mxu0 %v482
        %521 = vmatpush.msra.mxu0 %v474
        %522 = vmatpush.msra.mxu0 %v466
        %523 = vmatpush.msra.mxu0 %v458
        %524 = vmatpush.msra.mxu0 %v416
        %525 = vmatpush.msra.mxu0 %v450
        %526 = vmatpush.msra.mxu0 %v442
        %527 = vmatpush.msra.mxu0 %v434
        %528 = vmatpush.msra.mxu0 %v426
        %529 = vmatmul.f32.gmra.mxu0 %v491
        %v530 = vpop.f32.mrf.mxu0
        %v531 = vadd.f32 %v488, %v530
        %532 = vdwg.mxu0
        %v533 = vadd.f32 %v511, %v233
        %v534 = vadd.f32 %v531, %v234
        %535 = vst [vmem:[%s232] sm:$0xff] %v533
        %536 = vst [vmem:[%s232 + $0x8] sm:$0xff] %v534
        %s537 = sand.u32 %s119, 1
        %s538 = scalar_lea.sflag [#allocation4], %s537
        %s539 = sand.u32 %s119, 1
        %s540 = smul.addr %s539, 16
        %s541 = scalar_lea.vmem [#allocation7], %s540
        // Predicated region
        $region45: #{tpu_custom_call.1} parent=35 // pred_check
          %p542 = pneg %p129
        $region46: #{tpu_custom_call.1} parent=35 // pred_check_branch
          %544 = sbr.rel (%p542) target = $region48
        $region47: #{tpu_custom_call.1} parent=35 // pred_region
          %546 = vsyncadd %s538, 0
          %s547 = smul.addr %s22, 2
          %s548 = smul.addr %s547, 8
          %s549 = scalar_lea.hbm %s4, %s548
          %s551 = sshll.u32 %s541, 4
          %s552 = int_to_ptr.vmem [resolvable:$true] %s551
          %s553 = sshll.u32 %s549, 4
          %s554 = int_to_ptr.hbm [resolvable:$true] %s553
          %556 = dma.vmem_to_hbm [thread:$0]  %s552, 256, %s554, %s538
        $region48: #{tpu_custom_call.1} parent=35 // pred_fallthru
          _
      $region36: #{tpu_custom_call.1} parent=5 // pred_fallthru
        _
      %p557 = scmp.le.s32.totalorder 2, %s17
      // Predicated region
      $region49: #{tpu_custom_call.1} parent=5 // pred_check
        %p558 = pneg %p557
      $region50: #{tpu_custom_call.1} parent=5 // pred_check_branch
        %560 = sbr.rel (%p558) target = $region52
      $region51: #{tpu_custom_call.1} parent=5 // pred_region
        %s561 = ssub.s32 %s17, 2
        // Predicated region
        $region53: #{tpu_custom_call.1} parent=51 // pred_check
          %p562 = pneg %p135
        $region54: #{tpu_custom_call.1} parent=51 // pred_check_branch
          %564 = sbr.rel (%p562) target = $region56
        $region55: #{tpu_custom_call.1} parent=51 // pred_region
          %s565 = sand.u32 %s120, 1
          %s566 = scalar_lea.sflag [#allocation4], %s565
          %s567 = sand.u32 %s120, 1
          %s568 = smul.addr %s567, 16
          %s569 = scalar_lea.vmem [#allocation7], %s568
          %571 = dma.done %s566, 256
        $region56: #{tpu_custom_call.1} parent=51 // pred_fallthru
          _
      $region52: #{tpu_custom_call.1} parent=5 // pred_fallthru
        _
    $region6: #{tpu_custom_call.1} parent=1 // loop_footer
      %s21 = sadd.s32 1, %s17
    $region7: #{tpu_custom_call.1} parent=1 // loop_footer_branch
      %16 = sbr.rel target = $region3
    $region8: #{tpu_custom_call.1} parent=1 // loop_exit
      _
    %572 = vsyncpa [#allocation3], 1
    %s573 = scalar_lea.sflag [#allocation3], 1
    %574 = vsyncpa %s573, 1
    %575 = vsyncpa [#allocation6], 1
    %576 = vsyncpa [#allocation4], 1
    %s577 = scalar_lea.sflag [#allocation4], 1
    %578 = vsyncpa %s577, 1

</llo_original>
